<compile_context>
chip_gen: v7x
topology: tpu7x:2x2x1
jax: 0.10.0
libtpu: 0.0.40
codegen_flags: <defaults>
</compile_context>

<pallas_src>
import functools
import jax
import jax.numpy as jnp
from jax.experimental import pallas as pl
from jax.experimental.pallas import tpu as pltpu


def _round_up(x, m):
    return ((x + m - 1) // m) * m


def _guided_fusion_kernel(bn_scale_ref, bn_shift_ref, x_ref,
                          hmask_ref, hexpand_ref,
                          wq_ref, bq_ref, wk_ref, bk_ref,
                          wv_ref, bv_ref, wo_ref, bo_ref,
                          out_ref, attnw_ref,
                          *, num_heads, num_views):
    """One batch tile (TB rows): BN+ReLU on K/V, all-head attention, out-proj, ReLU."""
    M = num_views
    H = num_heads
    TB = x_ref.shape[1]

    # ---- Q projection: one (TB,E)x(E,E) bf16 MXU matmul, f32 accumulate.
    verbal = x_ref[0]                                                        # (TB, E) f32
    Q = jnp.dot(verbal.astype(jnp.bfloat16), wq_ref[...],
                preferred_element_type=jnp.float32) + bq_ref[...]            # (TB, E)

    # ---- Per-modality BN(eval, scalar per channel) + ReLU, stacked along sublanes.
    kv_list = []
    for m in range(M):
        kv_list.append(jnp.maximum(
            x_ref[1 + m] * bn_scale_ref[m] + bn_shift_ref[m], 0.0))          # (TB, E)
    kv_all = jnp.concatenate(kv_list, axis=0)                                # (M*TB, E)
    kv_bf16 = kv_all.astype(jnp.bfloat16)

    # ---- Merged K/V projections: ONE (M*TB,E)x(E,E) matmul each (weights pushed once).
    K_all = jnp.dot(kv_bf16, wk_ref[...],
                    preferred_element_type=jnp.float32) + bk_ref[...]        # (M*TB, E)
    V_all = jnp.dot(kv_bf16, wv_ref[...],
                    preferred_element_type=jnp.float32) + bv_ref[...]        # (M*TB, E)

    # ---- All-head scores for every modality in ONE dot against the head-mask (f32 path
    #      for accuracy; output width H is tiny so the f32 MXU cost is negligible).
    #      hmask is the constant (E,H) head-indicator matrix with 1/sqrt(D) folded in.
    Q_rep = jnp.concatenate([Q] * M, axis=0)                                 # (M*TB, E)
    S_all = jnp.dot(Q_rep * K_all, hmask_ref[...],
                    preferred_element_type=jnp.float32)                      # (M*TB, H)

    # ---- Fused softmax over the M key positions (rows stacked by modality).
    s_list = [S_all[m * TB:(m + 1) * TB] for m in range(M)]                  # static slices
    smax = s_list[0]
    for m in range(1, M):
        smax = jnp.maximum(smax, s_list[m])
    p_list = [jnp.exp(s - smax) for s in s_list]
    denom = p_list[0]
    for m in range(1, M):
        denom = denom + p_list[m]
    inv = pl.reciprocal(denom, approx=True)          # EUP vrcp (own VLIW slot)
    inv = inv * (2.0 - denom * inv)                  # one Newton step -> f32-level accuracy
    W_all = jnp.concatenate([p * inv for p in p_list], axis=0)               # (M*TB, H)

    # ---- ONE head->lane expansion matmul for all modalities, weight V, reduce over M.
    WE = jnp.dot(W_all, hexpand_ref[...],
                 preferred_element_type=jnp.float32)                         # (M*TB, E)
    AV = WE * V_all
    ah = AV[0:TB]
    for m in range(1, M):
        ah = ah + AV[m * TB:(m + 1) * TB]                                    # (TB, E)

    # ---- ONE out-projection matmul, bias, ReLU, lane-dense store.
    out = jnp.dot(ah.astype(jnp.bfloat16), wo_ref[...],
                  preferred_element_type=jnp.float32) + bo_ref[...]          # (TB, E)
    out_ref[...] = jnp.maximum(out, 0.0)

    # ---- Head-averaged attention weights, written once as a lane-dense (TB, MP) block.
    inv_h = 1.0 / float(H)
    cols = [jnp.sum(W_all[m * TB:(m + 1) * TB], axis=-1, keepdims=True) * inv_h
            for m in range(M)]                                               # (TB, 1) each
    MP = attnw_ref.shape[-1]
    pad = jnp.zeros((TB, MP - M), dtype=jnp.float32)
    attnw_ref[...] = jnp.concatenate(cols + [pad], axis=-1)                  # (TB, MP)


def guided_fusion_pallas(verbal, views, params, num_heads, *, block_b=256):
    """verbal: (B,E) f32; views: list of M (B,E) f32 arrays.

    Returns ((B,E) relu(attn_out), (B,M) head-averaged attention weights)."""
    B, E = verbal.shape
    M = len(views)
    assert M <= 128
    E_pad = params["wq"].shape[0]                 # padded once at init (multiple of 128)
    MP = 128                                      # lane-dense attn-weight output width

    # Batch tile: multiple of 8, <= block_b, and (when B allows) >=2 grid steps so both
    # v7x TensorCores get a share of the 'parallel' axis; 256 fills the v6e/v7x MXU rows.
    TB = min(block_b, max(8, _round_up((B + 1) // 2, 8)))
    B_pad = _round_up(B, TB)
    grid = (B_pad // TB,)

    # Pack verbal + views into ONE HBM array -> one lane-dense DMA per grid step.
    x = jnp.stack([verbal] + list(views), axis=0)                   # (M+1, B, E)
    x = jnp.pad(x, ((0, 0), (0, B_pad - B), (0, E_pad - E)))        # (M+1, B_pad, E_pad)

    row_spec = pl.BlockSpec((M + 1, TB, E_pad), lambda b: (0, b, 0))
    const2 = lambda shape: pl.BlockSpec(shape, lambda b: (0, 0))    # constant index_map:
    # Pallas does not re-fetch constant-index blocks across grid steps (weights stay
    # resident in VMEM for the whole pipeline).
    smem_spec = pl.BlockSpec(memory_space=pltpu.MemorySpace.SMEM)

    in_specs = [
        smem_spec, smem_spec, row_spec,
        const2((E_pad, num_heads)), const2((num_heads, E_pad)),
        const2((E_pad, E_pad)), const2((1, E_pad)),
        const2((E_pad, E_pad)), const2((1, E_pad)),
        const2((E_pad, E_pad)), const2((1, E_pad)),
        const2((E_pad, E_pad)), const2((1, E_pad)),
    ]
    out_specs = [pl.BlockSpec((TB, E_pad), lambda b: (b, 0)),
                 pl.BlockSpec((TB, MP), lambda b: (b, 0))]

    # Explicit VMEM budget: bf16 resident weights + double-buffered packed input tile +
    # double-buffered outputs + headroom for in-kernel f32 intermediates.  Never below the
    # 32 MiB default; capped for v7x's 64 MiB physical VMEM.
    vmem_need = (4 * E_pad * E_pad * 2
                 + 2 * E_pad * num_heads * 4 + 4 * E_pad * 4
                 + 2 * (M + 1) * TB * E_pad * 4
                 + 2 * TB * (E_pad + MP) * 4
                 + 8 * (M + 1) * TB * E_pad * 4)
    vmem_limit = min(max(32 << 20, 2 * vmem_need), 64 << 20)

    kernel = functools.partial(_guided_fusion_kernel,
                               num_heads=num_heads, num_views=M)

    out, attnw = pl.pallas_call(
        kernel,
        out_shape=(jax.ShapeDtypeStruct((B_pad, E_pad), jnp.float32),
                   jax.ShapeDtypeStruct((B_pad, MP), jnp.float32)),
        grid_spec=pltpu.PrefetchScalarGridSpec(
            num_scalar_prefetch=0,
            grid=grid,
            in_specs=in_specs,
            out_specs=out_specs,
        ),
        compiler_params=pltpu.CompilerParams(
            dimension_semantics=("parallel",),
            vmem_limit_bytes=vmem_limit),
    )(params["bn_scale"], params["bn_shift"], x,
      params["hmask"], params["hexpand"],
      params["wq"], params["bq"], params["wk"], params["bk"],
      params["wv"], params["bv"], params["wo"], params["bo"])
    return out[:B, :E], attnw[:B, :M]


class GuidedFusionJax:
    """JAX/Pallas port of the PyTorch GuidedFusion module (eval mode)."""

    def __init__(self, embed_size, view_modalities, guided_fusion_nhead,
                 guided_fusion_dropout, key):
        assert embed_size % guided_fusion_nhead == 0
        self.embed_size = embed_size
        self.view_modalities = list(view_modalities)
        self.nhead = guided_fusion_nhead
        self.dropout = guided_fusion_dropout  # unused (eval)
        E = embed_size
        H = guided_fusion_nhead
        D = E // H
        M = len(self.view_modalities)
        E_pad = max(128, _round_up(E, 128))
        ks = jax.random.split(key, 8)

        def xavier(k, shape):
            fan_in, fan_out = shape[0], shape[1]
            a = jnp.sqrt(6.0 / (fan_in + fan_out))
            return jax.random.uniform(k, shape, jnp.float32, -a, a)

        # MultiheadAttention params (already transposed so kernel does x @ W).
        wq = xavier(ks[0], (E, E))
        wk = xavier(ks[1], (E, E))
        wv = xavier(ks[2], (E, E))
        wo = xavier(ks[3], (E, E))
        bq = 0.01 * jax.random.normal(ks[4], (1, E), jnp.float32)
        bk = 0.01 * jax.random.normal(ks[5], (1, E), jnp.float32)
        bv = 0.01 * jax.random.normal(ks[6], (1, E), jnp.float32)
        bo = 0.01 * jax.random.normal(ks[7], (1, E), jnp.float32)

        # BatchNorm1d(len(view_modalities)) in eval mode: per-modality scalar fold.
        eps = 1e-5
        gamma = 1.0 + 0.1 * jnp.arange(M, dtype=jnp.float32)
        beta = 0.05 * jnp.arange(M, dtype=jnp.float32)
        running_mean = 0.02 * jnp.arange(M, dtype=jnp.float32)
        running_var = 1.0 + 0.1 * jnp.arange(M, dtype=jnp.float32)
        bn_scale = gamma / jnp.sqrt(running_var + eps)          # (M,)
        bn_shift = beta - running_mean * bn_scale               # (M,)

        # Constant head-indicator matrices (avoid per-head lane slicing in the kernel).
        head_ids = jnp.arange(E, dtype=jnp.int32) // D                          # (E,)
        hexpand = (jnp.arange(H, dtype=jnp.int32)[:, None]
                   == head_ids[None, :]).astype(jnp.float32)                    # (H, E)
        hmask = hexpand.T * (1.0 / jnp.sqrt(jnp.float32(D)))                    # (E, H)

        def pad2(a, r, c):
            return jnp.pad(a, ((0, r - a.shape[0]), (0, c - a.shape[1])))

        # Kernel-side params: E padded to a lane-dense multiple of 128, projection
        # weights cast to bf16 (MXU-native; f32 accumulation happens in the kernel).
        self.params = dict(
            wq=pad2(wq, E_pad, E_pad).astype(jnp.bfloat16),
            wk=pad2(wk, E_pad, E_pad).astype(jnp.bfloat16),
            wv=pad2(wv, E_pad, E_pad).astype(jnp.bfloat16),
            wo=pad2(wo, E_pad, E_pad).astype(jnp.bfloat16),
            bq=pad2(bq, 1, E_pad), bk=pad2(bk, 1, E_pad),
            bv=pad2(bv, 1, E_pad), bo=pad2(bo, 1, E_pad),
            hmask=pad2(hmask, E_pad, H),          # f32: keeps the Q.K score path accurate
            hexpand=pad2(hexpand, H, E_pad),      # f32: K-dim = H is tiny, cost negligible
            bn_scale=bn_scale.astype(jnp.float32),
            bn_shift=bn_shift.astype(jnp.float32),
        )
        # raw f32 params kept for the pure-JAX reference
        self._ref_params = dict(wq=wq, bq=bq, wk=wk, bk=bk, wv=wv, bv=bv, wo=wo, bo=bo)
        self._bn_raw = (gamma, beta, running_mean, running_var, eps)

    def __call__(self, view_embeds, verbal_embed):
        views = [view_embeds[m].astype(jnp.float32) for m in self.view_modalities]
        out, attnw = guided_fusion_pallas(verbal_embed.astype(jnp.float32),
                                          views, self.params, self.nhead)
        # dict indexing mirrors torch: guided_attn_embeds[i] on the BATCH axis (pre-squeeze).
        guided_embeds = {m: out[i:i + 1] for i, m in enumerate(self.view_modalities)}
        guided_attn_embeds = out                      # (B, E)  (squeeze(dim=1) applied)
        guided_attn_weight = attnw[:, None, :]        # (B, 1, M)
        return guided_embeds, guided_attn_embeds, guided_attn_weight

    # Pure-JAX reference (for validation only; pure f32).
    def reference(self, view_embeds, verbal_embed):
        E, H = self.embed_size, self.nhead
        D = E // H
        gamma, beta, rm, rv, eps = self._bn_raw
        views = jnp.stack([view_embeds[m] for m in self.view_modalities], axis=1)  # (B,M,E)
        kv = (views - rm[None, :, None]) / jnp.sqrt(rv[None, :, None] + eps)
        kv = jnp.maximum(kv * gamma[None, :, None] + beta[None, :, None], 0.0)
        p = self._ref_params
        B, M, _ = kv.shape
        Q = verbal_embed @ p["wq"] + p["bq"]          # (B, E)
        K = kv @ p["wk"] + p["bk"]                    # (B, M, E)
        V = kv @ p["wv"] + p["bv"]
        Qh = Q.reshape(B, H, D)
        Kh = K.reshape(B, M, H, D)
        Vh = V.reshape(B, M, H, D)
        s = jnp.einsum("bhd,bmhd->bhm", Qh, Kh) / jnp.sqrt(jnp.float32(D))
        w = jax.nn.softmax(s, axis=-1)                # (B, H, M)
        ah = jnp.einsum("bhm,bmhd->bhd", w, Vh).reshape(B, E)
        out = jnp.maximum(ah @ p["wo"] + p["bo"], 0.0)
        return out, jnp.mean(w, axis=1)               # (B,E), (B,M)


if __name__ == "__main__":
    key = jax.random.PRNGKey(0)
    k_mod, k_verb, k_v0, k_v1, k_v2 = jax.random.split(key, 5)

    B, E, H = 4, 32, 4
    modalities = ["rgb", "depth", "flow"]

    model = GuidedFusionJax(embed_size=E, view_modalities=modalities,
                            guided_fusion_nhead=H, guided_fusion_dropout=0.1,
                            key=k_mod)

    verbal_embed = jax.random.normal(k_verb, (B, E), jnp.float32)
    view_embeds = {
        "rgb": jax.random.normal(k_v0, (B, E), jnp.float32),
        "depth": jax.random.normal(k_v1, (B, E), jnp.float32),
        "flow": jax.random.normal(k_v2, (B, E), jnp.float32),
    }

    guided_embeds, guided_attn_embeds, guided_attn_weight = model(view_embeds, verbal_embed)
    jax.block_until_ready(guided_attn_embeds)
    jax.block_until_ready(guided_attn_weight)

    # Validate against the pure-f32 JAX reference.  Tolerances account for bf16 MXU
    # operands (Q/K/V/out projections) with f32 accumulation plus the EUP approximate-
    # reciprocal + Newton-step softmax normalization.
    ref_out, ref_w = model.reference(view_embeds, verbal_embed)
    assert guided_attn_embeds.shape == (B, E)
    assert guided_attn_weight.shape == (B, 1, len(modalities))
    assert jnp.allclose(guided_attn_embeds, ref_out, atol=5e-2, rtol=5e-2)
    assert jnp.allclose(guided_attn_weight[:, 0, :], ref_w, atol=2e-2, rtol=2e-2)
    for i, m in enumerate(modalities):
        assert guided_embeds[m].shape == (1, E)
        assert jnp.allclose(guided_embeds[m][0], ref_out[i], atol=5e-2, rtol=5e-2)

    print("KERNEL_OK")
</pallas_src>

<mosaic_0001>
module attributes {stable_mosaic.version = 11 : i64} {
  func.func @_guided_fusion_kernel(%arg0: i32, %arg1: memref<3xf32, #tpu.memory_space<smem>>, %arg2: memref<3xf32, #tpu.memory_space<smem>>, %arg3: memref<4x8x128xf32, #tpu.memory_space<vmem>>, %arg4: memref<128x4xf32, #tpu.memory_space<vmem>>, %arg5: memref<4x128xf32, #tpu.memory_space<vmem>>, %arg6: memref<128x128xbf16, #tpu.memory_space<vmem>>, %arg7: memref<1x128xf32, #tpu.memory_space<vmem>>, %arg8: memref<128x128xbf16, #tpu.memory_space<vmem>>, %arg9: memref<1x128xf32, #tpu.memory_space<vmem>>, %arg10: memref<128x128xbf16, #tpu.memory_space<vmem>>, %arg11: memref<1x128xf32, #tpu.memory_space<vmem>>, %arg12: memref<128x128xbf16, #tpu.memory_space<vmem>>, %arg13: memref<1x128xf32, #tpu.memory_space<vmem>>, %arg14: memref<8x128xf32, #tpu.memory_space<vmem>>, %arg15: memref<8x128xf32, #tpu.memory_space<vmem>>) attributes {dimension_semantics = [#tpu.dimension_semantics<parallel>], iteration_bounds = array<i64: 1>, scalar_prefetch = 0 : i64, scratch_operands = 0 : i64, tpu.core_type = #tpu.core_type<tc>, window_params = [{transform_indices = @transform_0, window_bounds = array<i64: 3>}, {transform_indices = @transform_1, window_bounds = array<i64: 3>}, {transform_indices = @transform_2, window_bounds = array<i64: 4, 8, 128>}, {pipeline_mode = #tpu.pipeline_mode<synchronous>, transform_indices = @transform_3, window_bounds = array<i64: 128, 4>}, {pipeline_mode = #tpu.pipeline_mode<synchronous>, transform_indices = @transform_4, window_bounds = array<i64: 4, 128>}, {pipeline_mode = #tpu.pipeline_mode<synchronous>, transform_indices = @transform_5, window_bounds = array<i64: 128, 128>}, {pipeline_mode = #tpu.pipeline_mode<synchronous>, transform_indices = @transform_6, window_bounds = array<i64: 1, 128>}, {pipeline_mode = #tpu.pipeline_mode<synchronous>, transform_indices = @transform_7, window_bounds = array<i64: 128, 128>}, {pipeline_mode = #tpu.pipeline_mode<synchronous>, transform_indices = @transform_8, window_bounds = array<i64: 1, 128>}, {pipeline_mode = #tpu.pipeline_mode<synchronous>, transform_indices = @transform_9, window_bounds = array<i64: 128, 128>}, {pipeline_mode = #tpu.pipeline_mode<synchronous>, transform_indices = @transform_10, window_bounds = array<i64: 1, 128>}, {pipeline_mode = #tpu.pipeline_mode<synchronous>, transform_indices = @transform_11, window_bounds = array<i64: 128, 128>}, {pipeline_mode = #tpu.pipeline_mode<synchronous>, transform_indices = @transform_12, window_bounds = array<i64: 1, 128>}, {transform_indices = @transform_13, window_bounds = array<i64: 8, 128>}, {transform_indices = @transform_14, window_bounds = array<i64: 8, 128>}]} {
    %c0 = arith.constant 0 : index
    %c0_0 = arith.constant 0 : index
    %c0_1 = arith.constant 0 : index
    %0 = vector.load %arg3[%c0, %c0_0, %c0_1] : memref<4x8x128xf32, #tpu.memory_space<vmem>>, vector<1x8x128xf32>
    %1 = vector.shape_cast %0 : vector<1x8x128xf32> to vector<8x128xf32>
    %2 = arith.truncf %1 : vector<8x128xf32> to vector<8x128xbf16>
    %c0_2 = arith.constant 0 : index
    %c0_3 = arith.constant 0 : index
    %3 = vector.load %arg6[%c0_2, %c0_3] : memref<128x128xbf16, #tpu.memory_space<vmem>>, vector<128x128xbf16>
    %cst = arith.constant dense<0.000000e+00> : vector<8x128xf32>
    %4 = tpu.matmul %2, %3, %cst {dimension_numbers = #tpu.dot_dimension_numbers<[1], [0], [0], [1], [0, 0, 1, 1], [], []>} : vector<8x128xbf16>, vector<128x128xbf16>, vector<8x128xf32> -> vector<8x128xf32>
    %c0_4 = arith.constant 0 : index
    %c0_5 = arith.constant 0 : index
    %5 = vector.load %arg7[%c0_4, %c0_5] : memref<1x128xf32, #tpu.memory_space<vmem>>, vector<1x128xf32>
    %6 = vector.broadcast %5 : vector<1x128xf32> to vector<8x128xf32>
    %7 = arith.addf %4, %6 : vector<8x128xf32>
    %c1 = arith.constant 1 : index
    %c0_6 = arith.constant 0 : index
    %c0_7 = arith.constant 0 : index
    %8 = vector.load %arg3[%c1, %c0_6, %c0_7] : memref<4x8x128xf32, #tpu.memory_space<vmem>>, vector<1x8x128xf32>
    %9 = vector.shape_cast %8 : vector<1x8x128xf32> to vector<8x128xf32>
    %c0_8 = arith.constant 0 : index
    %10 = memref.load %arg1[%c0_8] : memref<3xf32, #tpu.memory_space<smem>>
    %11 = vector.broadcast %10 : f32 to vector<8x128xf32>
    %12 = arith.mulf %9, %11 : vector<8x128xf32>
    %c0_9 = arith.constant 0 : index
    %13 = memref.load %arg2[%c0_9] : memref<3xf32, #tpu.memory_space<smem>>
    %14 = vector.broadcast %13 : f32 to vector<8x128xf32>
    %15 = arith.addf %12, %14 : vector<8x128xf32>
    %cst_10 = arith.constant 0.000000e+00 : f32
    %16 = vector.broadcast %cst_10 : f32 to vector<8x128xf32>
    %17 = arith.maximumf %15, %16 : vector<8x128xf32>
    %c2 = arith.constant 2 : index
    %c0_11 = arith.constant 0 : index
    %c0_12 = arith.constant 0 : index
    %18 = vector.load %arg3[%c2, %c0_11, %c0_12] : memref<4x8x128xf32, #tpu.memory_space<vmem>>, vector<1x8x128xf32>
    %19 = vector.shape_cast %18 : vector<1x8x128xf32> to vector<8x128xf32>
    %c1_13 = arith.constant 1 : index
    %20 = memref.load %arg1[%c1_13] : memref<3xf32, #tpu.memory_space<smem>>
    %21 = vector.broadcast %20 : f32 to vector<8x128xf32>
    %22 = arith.mulf %19, %21 : vector<8x128xf32>
    %c1_14 = arith.constant 1 : index
    %23 = memref.load %arg2[%c1_14] : memref<3xf32, #tpu.memory_space<smem>>
    %24 = vector.broadcast %23 : f32 to vector<8x128xf32>
    %25 = arith.addf %22, %24 : vector<8x128xf32>
    %cst_15 = arith.constant 0.000000e+00 : f32
    %26 = vector.broadcast %cst_15 : f32 to vector<8x128xf32>
    %27 = arith.maximumf %25, %26 : vector<8x128xf32>
    %c3 = arith.constant 3 : index
    %c0_16 = arith.constant 0 : index
    %c0_17 = arith.constant 0 : index
    %28 = vector.load %arg3[%c3, %c0_16, %c0_17] : memref<4x8x128xf32, #tpu.memory_space<vmem>>, vector<1x8x128xf32>
    %29 = vector.shape_cast %28 : vector<1x8x128xf32> to vector<8x128xf32>
    %c2_18 = arith.constant 2 : index
    %30 = memref.load %arg1[%c2_18] : memref<3xf32, #tpu.memory_space<smem>>
    %31 = vector.broadcast %30 : f32 to vector<8x128xf32>
    %32 = arith.mulf %29, %31 : vector<8x128xf32>
    %c2_19 = arith.constant 2 : index
    %33 = memref.load %arg2[%c2_19] : memref<3xf32, #tpu.memory_space<smem>>
    %34 = vector.broadcast %33 : f32 to vector<8x128xf32>
    %35 = arith.addf %32, %34 : vector<8x128xf32>
    %cst_20 = arith.constant 0.000000e+00 : f32
    %36 = vector.broadcast %cst_20 : f32 to vector<8x128xf32>
    %37 = arith.maximumf %35, %36 : vector<8x128xf32>
    %38 = tpu.concatenate %17, %27, %37 in 0 : vector<8x128xf32>, vector<8x128xf32>, vector<8x128xf32> -> vector<24x128xf32>
    %39 = arith.truncf %38 : vector<24x128xf32> to vector<24x128xbf16>
    %c0_21 = arith.constant 0 : index
    %c0_22 = arith.constant 0 : index
    %40 = vector.load %arg8[%c0_21, %c0_22] : memref<128x128xbf16, #tpu.memory_space<vmem>>, vector<128x128xbf16>
    %cst_23 = arith.constant dense<0.000000e+00> : vector<24x128xf32>
    %41 = tpu.matmul %39, %40, %cst_23 {dimension_numbers = #tpu.dot_dimension_numbers<[1], [0], [0], [1], [0, 0, 1, 1], [], []>} : vector<24x128xbf16>, vector<128x128xbf16>, vector<24x128xf32> -> vector<24x128xf32>
    %c0_24 = arith.constant 0 : index
    %c0_25 = arith.constant 0 : index
    %42 = vector.load %arg9[%c0_24, %c0_25] : memref<1x128xf32, #tpu.memory_space<vmem>>, vector<1x128xf32>
    %43 = vector.broadcast %42 : vector<1x128xf32> to vector<24x128xf32>
    %44 = arith.addf %41, %43 : vector<24x128xf32>
    %c0_26 = arith.constant 0 : index
    %c0_27 = arith.constant 0 : index
    %45 = vector.load %arg10[%c0_26, %c0_27] : memref<128x128xbf16, #tpu.memory_space<vmem>>, vector<128x128xbf16>
    %cst_28 = arith.constant dense<0.000000e+00> : vector<24x128xf32>
    %46 = tpu.matmul %39, %45, %cst_28 {dimension_numbers = #tpu.dot_dimension_numbers<[1], [0], [0], [1], [0, 0, 1, 1], [], []>} : vector<24x128xbf16>, vector<128x128xbf16>, vector<24x128xf32> -> vector<24x128xf32>
    %c0_29 = arith.constant 0 : index
    %c0_30 = arith.constant 0 : index
    %47 = vector.load %arg11[%c0_29, %c0_30] : memref<1x128xf32, #tpu.memory_space<vmem>>, vector<1x128xf32>
    %48 = vector.broadcast %47 : vector<1x128xf32> to vector<24x128xf32>
    %49 = arith.addf %46, %48 : vector<24x128xf32>
    %50 = tpu.concatenate %7, %7, %7 in 0 : vector<8x128xf32>, vector<8x128xf32>, vector<8x128xf32> -> vector<24x128xf32>
    %51 = arith.mulf %50, %44 : vector<24x128xf32>
    %c0_31 = arith.constant 0 : index
    %c0_32 = arith.constant 0 : index
    %52 = vector.load %arg4[%c0_31, %c0_32] : memref<128x4xf32, #tpu.memory_space<vmem>>, vector<128x4xf32>
    %cst_33 = arith.constant dense<0.000000e+00> : vector<24x4xf32>
    %53 = tpu.matmul %51, %52, %cst_33 {dimension_numbers = #tpu.dot_dimension_numbers<[1], [0], [0], [1], [0, 0, 1, 1], [], []>} : vector<24x128xf32>, vector<128x4xf32>, vector<24x4xf32> -> vector<24x4xf32>
    %54 = vector.extract_strided_slice %53 {offsets = [0, 0], sizes = [8, 4], strides = [1, 1]} : vector<24x4xf32> to vector<8x4xf32>
    %55 = vector.extract_strided_slice %53 {offsets = [8, 0], sizes = [8, 4], strides = [1, 1]} : vector<24x4xf32> to vector<8x4xf32>
    %56 = vector.extract_strided_slice %53 {offsets = [16, 0], sizes = [8, 4], strides = [1, 1]} : vector<24x4xf32> to vector<8x4xf32>
    %57 = arith.maximumf %54, %55 : vector<8x4xf32>
    %58 = arith.maximumf %57, %56 : vector<8x4xf32>
    %59 = arith.subf %54, %58 : vector<8x4xf32>
    %60 = math.exp %59 : vector<8x4xf32>
    %61 = arith.subf %55, %58 : vector<8x4xf32>
    %62 = math.exp %61 : vector<8x4xf32>
    %63 = arith.subf %56, %58 : vector<8x4xf32>
    %64 = math.exp %63 : vector<8x4xf32>
    %65 = arith.addf %60, %62 : vector<8x4xf32>
    %66 = arith.addf %65, %64 : vector<8x4xf32>
    %67 = tpu.reciprocal %66 {approx = true} : vector<8x4xf32> -> vector<8x4xf32>
    %68 = arith.mulf %66, %67 : vector<8x4xf32>
    %cst_34 = arith.constant 2.000000e+00 : f32
    %69 = vector.broadcast %cst_34 : f32 to vector<8x4xf32>
    %70 = arith.subf %69, %68 : vector<8x4xf32>
    %71 = arith.mulf %67, %70 : vector<8x4xf32>
    %72 = arith.mulf %60, %71 : vector<8x4xf32>
    %73 = arith.mulf %62, %71 : vector<8x4xf32>
    %74 = arith.mulf %64, %71 : vector<8x4xf32>
    %75 = tpu.concatenate %72, %73, %74 in 0 : vector<8x4xf32>, vector<8x4xf32>, vector<8x4xf32> -> vector<24x4xf32>
    %c0_35 = arith.constant 0 : index
    %c0_36 = arith.constant 0 : index
    %76 = vector.load %arg5[%c0_35, %c0_36] : memref<4x128xf32, #tpu.memory_space<vmem>>, vector<4x128xf32>
    %cst_37 = arith.constant dense<0.000000e+00> : vector<24x128xf32>
    %77 = tpu.matmul %75, %76, %cst_37 {dimension_numbers = #tpu.dot_dimension_numbers<[1], [0], [0], [1], [0, 0, 1, 1], [], []>} : vector<24x4xf32>, vector<4x128xf32>, vector<24x128xf32> -> vector<24x128xf32>
    %78 = arith.mulf %77, %49 : vector<24x128xf32>
    %79 = vector.extract_strided_slice %78 {offsets = [0, 0], sizes = [8, 128], strides = [1, 1]} : vector<24x128xf32> to vector<8x128xf32>
    %80 = vector.extract_strided_slice %78 {offsets = [8, 0], sizes = [8, 128], strides = [1, 1]} : vector<24x128xf32> to vector<8x128xf32>
    %81 = arith.addf %79, %80 : vector<8x128xf32>
    %82 = vector.extract_strided_slice %78 {offsets = [16, 0], sizes = [8, 128], strides = [1, 1]} : vector<24x128xf32> to vector<8x128xf32>
    %83 = arith.addf %81, %82 : vector<8x128xf32>
    %84 = arith.truncf %83 : vector<8x128xf32> to vector<8x128xbf16>
    %c0_38 = arith.constant 0 : index
    %c0_39 = arith.constant 0 : index
    %85 = vector.load %arg12[%c0_38, %c0_39] : memref<128x128xbf16, #tpu.memory_space<vmem>>, vector<128x128xbf16>
    %cst_40 = arith.constant dense<0.000000e+00> : vector<8x128xf32>
    %86 = tpu.matmul %84, %85, %cst_40 {dimension_numbers = #tpu.dot_dimension_numbers<[1], [0], [0], [1], [0, 0, 1, 1], [], []>} : vector<8x128xbf16>, vector<128x128xbf16>, vector<8x128xf32> -> vector<8x128xf32>
    %c0_41 = arith.constant 0 : index
    %c0_42 = arith.constant 0 : index
    %87 = vector.load %arg13[%c0_41, %c0_42] : memref<1x128xf32, #tpu.memory_space<vmem>>, vector<1x128xf32>
    %88 = vector.broadcast %87 : vector<1x128xf32> to vector<8x128xf32>
    %89 = arith.addf %86, %88 : vector<8x128xf32>
    %cst_43 = arith.constant 0.000000e+00 : f32
    %90 = vector.broadcast %cst_43 : f32 to vector<8x128xf32>
    %91 = arith.maximumf %89, %90 : vector<8x128xf32>
    %c0_44 = arith.constant 0 : index
    %c0_45 = arith.constant 0 : index
    %92 = vector.load %arg14[%c0_44, %c0_45] : memref<8x128xf32, #tpu.memory_space<vmem>>, vector<8x128xf32>
    tpu.vector_store %arg14[%c0_44, %c0_45], %91 {strides = array<i32>} : memref<8x128xf32, #tpu.memory_space<vmem>>, vector<8x128xf32>,
    %93 = vector.extract_strided_slice %75 {offsets = [0, 0], sizes = [8, 4], strides = [1, 1]} : vector<24x4xf32> to vector<8x4xf32>
    %cst_46 = arith.constant dense<0.000000e+00> : vector<8xf32>
    %94 = vector.multi_reduction <add>, %93, %cst_46 [1] : vector<8x4xf32> to vector<8xf32>
    %95 = vector.shape_cast %94 : vector<8xf32> to vector<8x1xf32>
    %cst_47 = arith.constant 2.500000e-01 : f32
    %96 = vector.broadcast %cst_47 : f32 to vector<8x1xf32>
    %97 = arith.mulf %95, %96 : vector<8x1xf32>
    %98 = vector.extract_strided_slice %75 {offsets = [8, 0], sizes = [8, 4], strides = [1, 1]} : vector<24x4xf32> to vector<8x4xf32>
    %cst_48 = arith.constant dense<0.000000e+00> : vector<8xf32>
    %99 = vector.multi_reduction <add>, %98, %cst_48 [1] : vector<8x4xf32> to vector<8xf32>
    %100 = vector.shape_cast %99 : vector<8xf32> to vector<8x1xf32>
    %cst_49 = arith.constant 2.500000e-01 : f32
    %101 = vector.broadcast %cst_49 : f32 to vector<8x1xf32>
    %102 = arith.mulf %100, %101 : vector<8x1xf32>
    %103 = vector.extract_strided_slice %75 {offsets = [16, 0], sizes = [8, 4], strides = [1, 1]} : vector<24x4xf32> to vector<8x4xf32>
    %cst_50 = arith.constant dense<0.000000e+00> : vector<8xf32>
    %104 = vector.multi_reduction <add>, %103, %cst_50 [1] : vector<8x4xf32> to vector<8xf32>
    %105 = vector.shape_cast %104 : vector<8xf32> to vector<8x1xf32>
    %cst_51 = arith.constant 2.500000e-01 : f32
    %106 = vector.broadcast %cst_51 : f32 to vector<8x1xf32>
    %107 = arith.mulf %105, %106 : vector<8x1xf32>
    %cst_52 = arith.constant 0.000000e+00 : f32
    %108 = vector.broadcast %cst_52 : f32 to vector<8x125xf32>
    %109 = tpu.concatenate %97, %102, %107, %108 in 1 : vector<8x1xf32>, vector<8x1xf32>, vector<8x1xf32>, vector<8x125xf32> -> vector<8x128xf32>
    %c0_53 = arith.constant 0 : index
    %c0_54 = arith.constant 0 : index
    %110 = vector.load %arg15[%c0_53, %c0_54] : memref<8x128xf32, #tpu.memory_space<vmem>>, vector<8x128xf32>
    tpu.vector_store %arg15[%c0_53, %c0_54], %109 {strides = array<i32>} : memref<8x128xf32, #tpu.memory_space<vmem>>, vector<8x128xf32>,
    return
  }
  func.func @transform_0(%arg0: i32) -> i32 {
    %c0_i32 = arith.constant 0 : i32
    %c0_i32_0 = arith.constant 0 : i32
    return %c0_i32 : i32
  }
  func.func @transform_1(%arg0: i32) -> i32 {
    %c0_i32 = arith.constant 0 : i32
    %c0_i32_0 = arith.constant 0 : i32
    return %c0_i32 : i32
  }
  func.func @transform_2(%arg0: i32) -> (i32, i32, i32) {
    %c0_i32 = arith.constant 0 : i32
    %c0_i32_0 = arith.constant 0 : i32
    %c0_i32_1 = arith.constant 0 : i32
    return %c0_i32, %arg0, %c0_i32_0 : i32, i32, i32
  }
  func.func @transform_3(%arg0: i32) -> (i32, i32) {
    %c0_i32 = arith.constant 0 : i32
    %c0_i32_0 = arith.constant 0 : i32
    %c0_i32_1 = arith.constant 0 : i32
    return %c0_i32, %c0_i32_0 : i32, i32
  }
  func.func @transform_4(%arg0: i32) -> (i32, i32) {
    %c0_i32 = arith.constant 0 : i32
    %c0_i32_0 = arith.constant 0 : i32
    %c0_i32_1 = arith.constant 0 : i32
    return %c0_i32, %c0_i32_0 : i32, i32
  }
  func.func @transform_5(%arg0: i32) -> (i32, i32) {
    %c0_i32 = arith.constant 0 : i32
    %c0_i32_0 = arith.constant 0 : i32
    %c0_i32_1 = arith.constant 0 : i32
    return %c0_i32, %c0_i32_0 : i32, i32
  }
  func.func @transform_6(%arg0: i32) -> (i32, i32) {
    %c0_i32 = arith.constant 0 : i32
    %c0_i32_0 = arith.constant 0 : i32
    %c0_i32_1 = arith.constant 0 : i32
    return %c0_i32, %c0_i32_0 : i32, i32
  }
  func.func @transform_7(%arg0: i32) -> (i32, i32) {
    %c0_i32 = arith.constant 0 : i32
    %c0_i32_0 = arith.constant 0 : i32
    %c0_i32_1 = arith.constant 0 : i32
    return %c0_i32, %c0_i32_0 : i32, i32
  }
  func.func @transform_8(%arg0: i32) -> (i32, i32) {
    %c0_i32 = arith.constant 0 : i32
    %c0_i32_0 = arith.constant 0 : i32
    %c0_i32_1 = arith.constant 0 : i32
    return %c0_i32, %c0_i32_0 : i32, i32
  }
  func.func @transform_9(%arg0: i32) -> (i32, i32) {
    %c0_i32 = arith.constant 0 : i32
    %c0_i32_0 = arith.constant 0 : i32
    %c0_i32_1 = arith.constant 0 : i32
    return %c0_i32, %c0_i32_0 : i32, i32
  }
  func.func @transform_10(%arg0: i32) -> (i32, i32) {
    %c0_i32 = arith.constant 0 : i32
    %c0_i32_0 = arith.constant 0 : i32
    %c0_i32_1 = arith.constant 0 : i32
    return %c0_i32, %c0_i32_0 : i32, i32
  }
  func.func @transform_11(%arg0: i32) -> (i32, i32) {
    %c0_i32 = arith.constant 0 : i32
    %c0_i32_0 = arith.constant 0 : i32
    %c0_i32_1 = arith.constant 0 : i32
    return %c0_i32, %c0_i32_0 : i32, i32
  }
  func.func @transform_12(%arg0: i32) -> (i32, i32) {
    %c0_i32 = arith.constant 0 : i32
    %c0_i32_0 = arith.constant 0 : i32
    %c0_i32_1 = arith.constant 0 : i32
    return %c0_i32, %c0_i32_0 : i32, i32
  }
  func.func @transform_13(%arg0: i32) -> (i32, i32) {
    %c0_i32 = arith.constant 0 : i32
    %c0_i32_0 = arith.constant 0 : i32
    return %arg0, %c0_i32 : i32, i32
  }
  func.func @transform_14(%arg0: i32) -> (i32, i32) {
    %c0_i32 = arith.constant 0 : i32
    %c0_i32_0 = arith.constant 0 : i32
    return %arg0, %c0_i32 : i32, i32
  }
}

</mosaic_0001>

<llo_original>
// kernel: tpu_custom_call.1
$region0: #{tpu_custom_call.1}
  #allocation0 [shape = 'u32[]', space=smem, size = 0x4, offset = 0x4, fixed_abs, tag = 'smem constant byte address 0x4 - core index']
  #allocation1 [shape = 'u32[144,128]{1,0:T(1,128)}', space=vmem, size = 0x12000, scoped, tag = 'internal scratch']
  %s0 = inlined_call_operand.hbm [shape: f32[3], index: 0, kind: input, shape index: {}]
  %s1 = inlined_call_operand.vmem [shape: f32[3], index: 1, kind: input, shape index: {}]
  %s2 = inlined_call_operand.hbm [shape: f32[4,8,128], index: 2, kind: input, shape index: {}]
  %s3 = inlined_call_operand.vmem [shape: f32[128,4], index: 3, kind: input, shape index: {}]
  %s4 = inlined_call_operand.vmem [shape: f32[4,128], index: 4, kind: input, shape index: {}]
  %s5 = inlined_call_operand.vmem [shape: bf16[128,128], index: 5, kind: input, shape index: {}]
  %s6 = inlined_call_operand.vmem [shape: f32[1,128], index: 6, kind: input, shape index: {}]
  %s7 = inlined_call_operand.vmem [shape: bf16[128,128], index: 7, kind: input, shape index: {}]
  %s8 = inlined_call_operand.vmem [shape: f32[1,128], index: 8, kind: input, shape index: {}]
  %s9 = inlined_call_operand.hbm [shape: bf16[128,128], index: 9, kind: input, shape index: {}]
  %s10 = inlined_call_operand.vmem [shape: f32[1,128], index: 10, kind: input, shape index: {}]
  %s11 = inlined_call_operand.hbm [shape: bf16[128,128], index: 11, kind: input, shape index: {}]
  %s12 = inlined_call_operand.vmem [shape: f32[1,128], index: 12, kind: input, shape index: {}]
  %s13 = inlined_call_operand.hbm [shape: f32[8,128], index: 13, kind: output, shape index: {0}]
  %s14 = inlined_call_operand.hbm [shape: f32[8,128], index: 14, kind: output, shape index: {1}]
  %15 = xla_tuple %s13, %s14
  %s16 = sld [smem:[#allocation0]]
  $region90: #{tpu_custom_call.1} parent=0
    _
  %s18 = ssub.s32 1, %s16
  %s19 = scalar_select 0, %s18, %s16
  $region1: #{tpu_custom_call.1} parent=0
    #allocation2 [shape = 'u8[512]{0}', space=smem, size = 0x200, scoped, tag = 'input window, operand 0, single buffered']
    #allocation3 [shape = 's32[1]{0}', space=sflag, size = 0x4, scoped, tag = 'scoped memory for tpu_custom_call.1']
    #allocation4 [shape = 's32[1]{0}', space=sflag, size = 0x4, scoped, tag = 'scoped memory for tpu_custom_call.1']
    #allocation5 [shape = 's32[1]{0}', space=sflag, size = 0x4, scoped, tag = 'scoped memory for tpu_custom_call.1']
    #allocation6 [shape = 's32[1]{0}', space=sflag, size = 0x4, scoped, tag = 'scoped memory for tpu_custom_call.1']
    #allocation7 [shape = 'u8[512]{0}', space=smem, size = 0x200, scoped, tag = 'input window, operand 1, single buffered']
    #allocation8 [shape = 'u8[16384]{0}', space=vmem, size = 0x4000, scoped, tag = 'input window, operand 2, single buffered']
    #allocation9 [shape = 'u8[32768]{0}', space=vmem, size = 0x8000, scoped, tag = 'input window, operand 9, single buffered']
    #allocation10 [shape = 's32[1]{0}', space=sflag, size = 0x4, scoped, tag = 'scoped memory for tpu_custom_call.1']
    #allocation11 [shape = 'u8[32768]{0}', space=vmem, size = 0x8000, scoped, tag = 'input window, operand 11, single buffered']
    #allocation12 [shape = 'u8[4096]{0}', space=vmem, size = 0x1000, scoped, tag = 'output window, operand 0, single buffered']
    #allocation13 [shape = 'u8[4096]{0}', space=vmem, size = 0x1000, scoped, tag = 'output window, operand 1, single buffered']
    #allocation14 [shape = 's32[1]{0}', space=sflag, size = 0x4, scoped, tag = 'scoped memory for tpu_custom_call.1']
    %20 = vsyncpa [#allocation5], 0
    %21 = vsyncpa [#allocation6], 0
    %22 = vsyncpa [#allocation3], 0
    %23 = vsyncpa [#allocation10], 0
    %24 = vsyncpa [#allocation4], 0
    %25 = vsyncpa [#allocation14], 0
    // Predicated region
    $region2: #{tpu_custom_call.1} parent=1 // pred_check
      _
    $region3: #{tpu_custom_call.1} parent=1 // pred_check_branch
      %27 = sbr.rel (0) target = $region5
    $region4: #{tpu_custom_call.1} parent=1 // pred_region
      %s29 = ssub.s32 16, 16
      %30 = vsyncadd [#allocation5], %s29
      %33 = dma.hbm_to_smem %s0, 16, [#allocation2], [#allocation5]
    $region5: #{tpu_custom_call.1} parent=1 // pred_fallthru
      _
    // Predicated region
    $region6: #{tpu_custom_call.1} parent=1 // pred_check
      _
    $region7: #{tpu_custom_call.1} parent=1 // pred_check_branch
      %35 = sbr.rel (0) target = $region9
    $region8: #{tpu_custom_call.1} parent=1 // pred_region
      %s37 = ssub.s32 16, 16
      %38 = vsyncadd [#allocation6], %s37
      %s40 = sshll.u32 %s1, 4
      %s41 = int_to_ptr.vmem [resolvable:$true] %s40
      %43 = dma.vmem_to_smem %s41, 16, [#allocation7], [#allocation6]
    $region9: #{tpu_custom_call.1} parent=1 // pred_fallthru
      _
    // Predicated region
    $region10: #{tpu_custom_call.1} parent=1 // pred_check
      _
    $region11: #{tpu_custom_call.1} parent=1 // pred_check_branch
      %45 = sbr.rel (0) target = $region13
    $region12: #{tpu_custom_call.1} parent=1 // pred_region
      %s47 = ssub.s32 512, 512
      %48 = vsyncadd [#allocation3], %s47
      %s49 = sshll.u32 [#allocation8], 4
      %s50 = int_to_ptr.vmem [resolvable:$true] %s49
      %55 = dma.hbm_to_vmem [thread:$0]  %s2, 512, %s50, [#allocation3], 128, 128, 8
    $region13: #{tpu_custom_call.1} parent=1 // pred_fallthru
      _
    // Predicated region
    $region14: #{tpu_custom_call.1} parent=1 // pred_check
      _
    $region15: #{tpu_custom_call.1} parent=1 // pred_check_branch
      %57 = sbr.rel (0) target = $region17
    $region16: #{tpu_custom_call.1} parent=1 // pred_region
      _
    $region17: #{tpu_custom_call.1} parent=1 // pred_fallthru
      _
    // Predicated region
    $region18: #{tpu_custom_call.1} parent=1 // pred_check
      _
    $region19: #{tpu_custom_call.1} parent=1 // pred_check_branch
      %59 = sbr.rel (0) target = $region21
    $region20: #{tpu_custom_call.1} parent=1 // pred_region
      _
    $region21: #{tpu_custom_call.1} parent=1 // pred_fallthru
      _
    // Predicated region
    $region22: #{tpu_custom_call.1} parent=1 // pred_check
      _
    $region23: #{tpu_custom_call.1} parent=1 // pred_check_branch
      %61 = sbr.rel (0) target = $region25
    $region24: #{tpu_custom_call.1} parent=1 // pred_region
      _
    $region25: #{tpu_custom_call.1} parent=1 // pred_fallthru
      _
    // Predicated region
    $region26: #{tpu_custom_call.1} parent=1 // pred_check
      _
    $region27: #{tpu_custom_call.1} parent=1 // pred_check_branch
      %63 = sbr.rel (0) target = $region29
    $region28: #{tpu_custom_call.1} parent=1 // pred_region
      _
    $region29: #{tpu_custom_call.1} parent=1 // pred_fallthru
      _
    // Predicated region
    $region30: #{tpu_custom_call.1} parent=1 // pred_check
      _
    $region31: #{tpu_custom_call.1} parent=1 // pred_check_branch
      %65 = sbr.rel (0) target = $region33
    $region32: #{tpu_custom_call.1} parent=1 // pred_region
      _
    $region33: #{tpu_custom_call.1} parent=1 // pred_fallthru
      _
    // Predicated region
    $region34: #{tpu_custom_call.1} parent=1 // pred_check
      _
    $region35: #{tpu_custom_call.1} parent=1 // pred_check_branch
      %67 = sbr.rel (0) target = $region37
    $region36: #{tpu_custom_call.1} parent=1 // pred_region
      _
    $region37: #{tpu_custom_call.1} parent=1 // pred_fallthru
      _
    // Predicated region
    $region38: #{tpu_custom_call.1} parent=1 // pred_check
      _
    $region39: #{tpu_custom_call.1} parent=1 // pred_check_branch
      %69 = sbr.rel (0) target = $region41
    $region40: #{tpu_custom_call.1} parent=1 // pred_region
      %s71 = ssub.s32 1024, 1024
      %72 = vsyncadd [#allocation10], %s71
      %s73 = sshll.u32 [#allocation9], 4
      %s74 = int_to_ptr.vmem [resolvable:$true] %s73
      %79 = dma.hbm_to_vmem [thread:$0]  %s9, 1024, %s74, [#allocation10], 64, 64, 4
    $region41: #{tpu_custom_call.1} parent=1 // pred_fallthru
      _
    // Predicated region
    $region42: #{tpu_custom_call.1} parent=1 // pred_check
      _
    $region43: #{tpu_custom_call.1} parent=1 // pred_check_branch
      %81 = sbr.rel (0) target = $region45
    $region44: #{tpu_custom_call.1} parent=1 // pred_region
      _
    $region45: #{tpu_custom_call.1} parent=1 // pred_fallthru
      _
    // Predicated region
    $region46: #{tpu_custom_call.1} parent=1 // pred_check
      _
    $region47: #{tpu_custom_call.1} parent=1 // pred_check_branch
      %83 = sbr.rel (0) target = $region49
    $region48: #{tpu_custom_call.1} parent=1 // pred_region
      %s85 = ssub.s32 1024, 1024
      %86 = vsyncadd [#allocation10], %s85
      %s87 = sshll.u32 [#allocation11], 4
      %s88 = int_to_ptr.vmem [resolvable:$true] %s87
      %93 = dma.hbm_to_vmem [thread:$0]  %s11, 1024, %s88, [#allocation10], 64, 64, 4
    $region49: #{tpu_custom_call.1} parent=1 // pred_fallthru
      _
    // Predicated region
    $region50: #{tpu_custom_call.1} parent=1 // pred_check
      _
    $region51: #{tpu_custom_call.1} parent=1 // pred_check_branch
      %95 = sbr.rel (0) target = $region53
    $region52: #{tpu_custom_call.1} parent=1 // pred_region
      _
    $region53: #{tpu_custom_call.1} parent=1 // pred_fallthru
      _
    // Predicated region
    $region54: #{tpu_custom_call.1} parent=1 // pred_check
      _
    $region55: #{tpu_custom_call.1} parent=1 // pred_check_branch
      %97 = sbr.rel (0) target = $region57
    $region56: #{tpu_custom_call.1} parent=1 // pred_region
      %98 = dma.done [#allocation5], 16
    $region57: #{tpu_custom_call.1} parent=1 // pred_fallthru
      _
    // Predicated region
    $region58: #{tpu_custom_call.1} parent=1 // pred_check
      _
    $region59: #{tpu_custom_call.1} parent=1 // pred_check_branch
      %100 = sbr.rel (0) target = $region61
    $region60: #{tpu_custom_call.1} parent=1 // pred_region
      %101 = dma.done [#allocation6], 16
    $region61: #{tpu_custom_call.1} parent=1 // pred_fallthru
      _
    // Predicated region
    $region62: #{tpu_custom_call.1} parent=1 // pred_check
      _
    $region63: #{tpu_custom_call.1} parent=1 // pred_check_branch
      %103 = sbr.rel (0) target = $region65
    $region64: #{tpu_custom_call.1} parent=1 // pred_region
      %104 = dma.done [#allocation3], 512
    $region65: #{tpu_custom_call.1} parent=1 // pred_fallthru
      _
    // Predicated region
    $region66: #{tpu_custom_call.1} parent=1 // pred_check
      _
    $region67: #{tpu_custom_call.1} parent=1 // pred_check_branch
      %106 = sbr.rel (0) target = $region69
    $region68: #{tpu_custom_call.1} parent=1 // pred_region
      %107 = dma.done [#allocation10], 1024
    $region69: #{tpu_custom_call.1} parent=1 // pred_fallthru
      _
    // Predicated region
    $region70: #{tpu_custom_call.1} parent=1 // pred_check
      _
    $region71: #{tpu_custom_call.1} parent=1 // pred_check_branch
      %109 = sbr.rel (0) target = $region73
    $region72: #{tpu_custom_call.1} parent=1 // pred_region
      %110 = dma.done [#allocation10], 1024
    $region73: #{tpu_custom_call.1} parent=1 // pred_fallthru
      _
    %111 = sfence
    %v113 = vld [vmem:[#allocation8] sm:$0xff]
    %v114 = vpack.c.bf16 %v113, %v113
    %v115 = vld [vmem:[%s5] sm:$0xf]
    %v116 = vld [vmem:[%s5 + $0x4] sm:$0xf]
    %v117 = vld [vmem:[%s5 + $0x8] sm:$0xf]
    %v118 = vld [vmem:[%s5 + $0xc] sm:$0xf]
    %v119 = vld [vmem:[%s5 + $0x10] sm:$0xf]
    %v120 = vld [vmem:[%s5 + $0x14] sm:$0xf]
    %v121 = vld [vmem:[%s5 + $0x18] sm:$0xf]
    %v122 = vld [vmem:[%s5 + $0x1c] sm:$0xf]
    %v123 = vld [vmem:[%s5 + $0x20] sm:$0xf]
    %v124 = vld [vmem:[%s5 + $0x24] sm:$0xf]
    %v125 = vld [vmem:[%s5 + $0x28] sm:$0xf]
    %v126 = vld [vmem:[%s5 + $0x2c] sm:$0xf]
    %v127 = vld [vmem:[%s5 + $0x30] sm:$0xf]
    %v128 = vld [vmem:[%s5 + $0x34] sm:$0xf]
    %v129 = vld [vmem:[%s5 + $0x38] sm:$0xf]
    %v130 = vld [vmem:[%s5 + $0x3c] sm:$0xf]
    %v131 = vld [vmem:[%s6] sm:$0x1]
    %v133 = vlaneseq
    %v134 = vshrl.u32 %v133, 7
    %v135 = vsub.s32 0, %v134
    %v136 = vrot.slane %v131, %v135
    %v154 = vunpack.c.l.b16 %v115
    %v155 = vunpack.c.l.b16 %v116
    %v156 = vunpack.c.l.b16 %v117
    %v157 = vunpack.c.l.b16 %v118
    %v158 = vunpack.c.l.b16 %v119
    %v159 = vunpack.c.l.b16 %v120
    %v160 = vunpack.c.l.b16 %v121
    %v161 = vunpack.c.l.b16 %v122
    %v162 = vunpack.c.l.b16 %v123
    %v163 = vunpack.c.l.b16 %v124
    %v164 = vunpack.c.l.b16 %v125
    %v165 = vunpack.c.l.b16 %v126
    %v166 = vunpack.c.l.b16 %v127
    %v167 = vunpack.c.l.b16 %v128
    %v168 = vunpack.c.l.b16 %v129
    %v169 = vunpack.c.l.b16 %v130
    %v170 = vpack.c.b16 %v155, %v154
    %v171 = vpack.c.b16 %v157, %v156
    %v172 = vpack.c.b16 %v159, %v158
    %v173 = vpack.c.b16 %v161, %v160
    %v174 = vpack.c.b16 %v163, %v162
    %v175 = vpack.c.b16 %v165, %v164
    %v176 = vpack.c.b16 %v167, %v166
    %v177 = vpack.c.b16 %v169, %v168
    %186 = vmatprep.subr.bf16.mxu0 0
    %187 = vmatpush1.bf16.msra.mxu0 %v170
    %188 = vmatprep.subr.bf16.mxu0 0
    %189 = vmatpush1.bf16.msra.mxu0 %v171
    %190 = vmatprep.subr.bf16.mxu0 0
    %191 = vmatpush1.bf16.msra.mxu0 %v172
    %192 = vmatprep.subr.bf16.mxu0 0
    %193 = vmatpush1.bf16.msra.mxu0 %v173
    %194 = vmatprep.subr.bf16.mxu0 0
    %195 = vmatpush1.bf16.msra.mxu0 %v174
    %196 = vmatprep.subr.bf16.mxu0 0
    %197 = vmatpush1.bf16.msra.mxu0 %v175
    %198 = vmatprep.subr.bf16.mxu0 0
    %199 = vmatpush1.bf16.msra.mxu0 %v176
    %200 = vmatprep.subr.bf16.mxu0 0
    %201 = vmatpush1.bf16.msra.mxu0 %v177
    %202 = vmatprep.subr.bf16.mxu0 0
    %203 = vmatpush1.bf16.msra.mxu0 0
    %204 = vmatprep.subr.bf16.mxu0 0
    %205 = vmatpush1.bf16.msra.mxu0 0
    %206 = vmatprep.subr.bf16.mxu0 0
    %207 = vmatpush1.bf16.msra.mxu0 0
    %208 = vmatprep.subr.bf16.mxu0 0
    %209 = vmatpush1.bf16.msra.mxu0 0
    %210 = vmatprep.subr.bf16.mxu0 0
    %211 = vmatpush1.bf16.msra.mxu0 0
    %212 = vmatprep.subr.bf16.mxu0 0
    %213 = vmatpush1.bf16.msra.mxu0 0
    %214 = vmatprep.subr.bf16.mxu0 0
    %215 = vmatpush1.bf16.msra.mxu0 0
    %216 = vmatprep.subr.bf16.mxu0 0
    %217 = vmatpush1.bf16.msra.mxu0 0
    %218 = vmatprep.mubr.bf16.mxu0 0
    %219 = vmatmul.mubr.bf16.gmra.mrb[0].mxu0 %v114
    %v220 = vpop.f32.mrb[0].mxu0
    %v221 = vadd.f32 %v136, %v220
    %v222 = vpop.f32.mrb[0].mxu0
    %v223 = vpop.f32.mrb[0].mxu0
    %v224 = vpop.f32.mrb[0].mxu0
    %225 = vdwg.mxu0
    %s226 = scalar_lea.vmem [#allocation8], 8
    %v227 = vld [vmem:[%s226] sm:$0xff]
    %s228 = sld [smem:[#allocation2]]
    %v229 = vstv %s228
    %v230 = vmul.f32 %v227, %v229
    %s231 = sld [smem:[#allocation7]]
    %v232 = vstv %s231
    %v233 = vadd.f32 %v230, %v232
    %v234 = vmax.f32 %v233, 0.0
    %s235 = scalar_lea.vmem [#allocation8], 16
    %v236 = vld [vmem:[%s235] sm:$0xff]
    %s237 = sld [smem:[#allocation2 + $0x1]]
    %v238 = vstv %s237
    %v239 = vmul.f32 %v236, %v238
    %s240 = sld [smem:[#allocation7 + $0x1]]
    %v241 = vstv %s240
    %v242 = vadd.f32 %v239, %v241
    %v243 = vmax.f32 %v242, 0.0
    %s244 = scalar_lea.vmem [#allocation8], 24
    %v245 = vld [vmem:[%s244] sm:$0xff]
    %s246 = sld [smem:[#allocation2 + $0x2]]
    %v247 = vstv %s246
    %v248 = vmul.f32 %v245, %v247
    %s249 = sld [smem:[#allocation7 + $0x2]]
    %v250 = vstv %s249
    %v251 = vadd.f32 %v248, %v250
    %v252 = vmax.f32 %v251, 0.0
    %v253 = vpack.c.bf16 %v243, %v234
    %v254 = vpack.c.bf16 %v252, %v252
    %v255 = vld [vmem:[%s7] sm:$0xf]
    %v256 = vld [vmem:[%s7 + $0x4] sm:$0xf]
    %v257 = vld [vmem:[%s7 + $0x8] sm:$0xf]
    %v258 = vld [vmem:[%s7 + $0xc] sm:$0xf]
    %v259 = vld [vmem:[%s7 + $0x10] sm:$0xf]
    %v260 = vld [vmem:[%s7 + $0x14] sm:$0xf]
    %v261 = vld [vmem:[%s7 + $0x18] sm:$0xf]
    %v262 = vld [vmem:[%s7 + $0x1c] sm:$0xf]
    %v263 = vld [vmem:[%s7 + $0x20] sm:$0xf]
    %v264 = vld [vmem:[%s7 + $0x24] sm:$0xf]
    %v265 = vld [vmem:[%s7 + $0x28] sm:$0xf]
    %v266 = vld [vmem:[%s7 + $0x2c] sm:$0xf]
    %v267 = vld [vmem:[%s7 + $0x30] sm:$0xf]
    %v268 = vld [vmem:[%s7 + $0x34] sm:$0xf]
    %v269 = vld [vmem:[%s7 + $0x38] sm:$0xf]
    %v270 = vld [vmem:[%s7 + $0x3c] sm:$0xf]
    %v271 = vld [vmem:[%s8] sm:$0x1]
    %v273 = vlaneseq
    %v274 = vshrl.u32 %v273, 7
    %v275 = vsub.s32 0, %v274
    %v276 = vrot.slane %v271, %v275
    %v294 = vunpack.c.l.b16 %v255
    %v295 = vunpack.c.l.b16 %v256
    %v296 = vunpack.c.l.b16 %v257
    %v297 = vunpack.c.l.b16 %v258
    %v298 = vunpack.c.l.b16 %v259
    %v299 = vunpack.c.l.b16 %v260
    %v300 = vunpack.c.l.b16 %v261
    %v301 = vunpack.c.l.b16 %v262
    %v302 = vunpack.c.l.b16 %v263
    %v303 = vunpack.c.l.b16 %v264
    %v304 = vunpack.c.l.b16 %v265
    %v305 = vunpack.c.l.b16 %v266
    %v306 = vunpack.c.l.b16 %v267
    %v307 = vunpack.c.l.b16 %v268
    %v308 = vunpack.c.l.b16 %v269
    %v309 = vunpack.c.l.b16 %v270
    %v310 = vpack.c.b16 %v295, %v294
    %v311 = vpack.c.b16 %v297, %v296
    %v312 = vpack.c.b16 %v299, %v298
    %v313 = vpack.c.b16 %v301, %v300
    %v314 = vpack.c.b16 %v303, %v302
    %v315 = vpack.c.b16 %v305, %v304
    %v316 = vpack.c.b16 %v307, %v306
    %v317 = vpack.c.b16 %v309, %v308
    %326 = vmatprep.subr.bf16.mxu0 0
    %327 = vmatpush1.bf16.msra.mxu0 %v310
    %328 = vmatprep.subr.bf16.mxu0 0
    %329 = vmatpush1.bf16.msra.mxu0 %v311
    %330 = vmatprep.subr.bf16.mxu0 0
    %331 = vmatpush1.bf16.msra.mxu0 %v312
    %332 = vmatprep.subr.bf16.mxu0 0
    %333 = vmatpush1.bf16.msra.mxu0 %v313
    %334 = vmatprep.subr.bf16.mxu0 0
    %335 = vmatpush1.bf16.msra.mxu0 %v314
    %336 = vmatprep.subr.bf16.mxu0 0
    %337 = vmatpush1.bf16.msra.mxu0 %v315
    %338 = vmatprep.subr.bf16.mxu0 0
    %339 = vmatpush1.bf16.msra.mxu0 %v316
    %340 = vmatprep.subr.bf16.mxu0 0
    %341 = vmatpush1.bf16.msra.mxu0 %v317
    %342 = vmatprep.subr.bf16.mxu0 0
    %343 = vmatpush1.bf16.msra.mxu0 0
    %344 = vmatprep.subr.bf16.mxu0 0
    %345 = vmatpush1.bf16.msra.mxu0 0
    %346 = vmatprep.subr.bf16.mxu0 0
    %347 = vmatpush1.bf16.msra.mxu0 0
    %348 = vmatprep.subr.bf16.mxu0 0
    %349 = vmatpush1.bf16.msra.mxu0 0
    %350 = vmatprep.subr.bf16.mxu0 0
    %351 = vmatpush1.bf16.msra.mxu0 0
    %352 = vmatprep.subr.bf16.mxu0 0
    %353 = vmatpush1.bf16.msra.mxu0 0
    %354 = vmatprep.subr.bf16.mxu0 0
    %355 = vmatpush1.bf16.msra.mxu0 0
    %356 = vmatprep.subr.bf16.mxu0 0
    %357 = vmatpush1.bf16.msra.mxu0 0
    %358 = vmatprep.mubr.bf16.mxu0 0
    %359 = vmatmul.mubr.bf16.gmra.mrb[0].mxu0 %v253
    %v360 = vpop.f32.mrb[0].mxu0
    %v361 = vadd.f32 %v276, %v360
    %v362 = vpop.f32.mrb[0].mxu0
    %v363 = vpop.f32.mrb[0].mxu0
    %v364 = vadd.f32 %v276, %v363
    %v365 = vpop.f32.mrb[0].mxu0
    %366 = vmatprep.mubr.bf16.mxu0 0
    %367 = vmatmul.mubr.bf16.gmra.mrb[0].mxu0 %v254
    %v368 = vpop.f32.mrb[0].mxu0
    %v369 = vadd.f32 %v276, %v368
    %v370 = vpop.f32.mrb[0].mxu0
    %v371 = vpop.f32.mrb[0].mxu0
    %v372 = vpop.f32.mrb[0].mxu0
    %373 = vdwg.mxu0
    %v374 = vld [vmem:[#allocation9] sm:$0xf]
    %v375 = vld [vmem:[#allocation9 + $0x4] sm:$0xf]
    %v376 = vld [vmem:[#allocation9 + $0x8] sm:$0xf]
    %v377 = vld [vmem:[#allocation9 + $0xc] sm:$0xf]
    %v378 = vld [vmem:[#allocation9 + $0x10] sm:$0xf]
    %v379 = vld [vmem:[#allocation9 + $0x14] sm:$0xf]
    %v380 = vld [vmem:[#allocation9 + $0x18] sm:$0xf]
    %v381 = vld [vmem:[#allocation9 + $0x1c] sm:$0xf]
    %v382 = vld [vmem:[#allocation9 + $0x20] sm:$0xf]
    %v383 = vld [vmem:[#allocation9 + $0x24] sm:$0xf]
    %v384 = vld [vmem:[#allocation9 + $0x28] sm:$0xf]
    %v385 = vld [vmem:[#allocation9 + $0x2c] sm:$0xf]
    %v386 = vld [vmem:[#allocation9 + $0x30] sm:$0xf]
    %v387 = vld [vmem:[#allocation9 + $0x34] sm:$0xf]
    %v388 = vld [vmem:[#allocation9 + $0x38] sm:$0xf]
    %v389 = vld [vmem:[#allocation9 + $0x3c] sm:$0xf]
    %v390 = vld [vmem:[%s10] sm:$0x1]
    %v392 = vlaneseq
    %v393 = vshrl.u32 %v392, 7
    %v394 = vsub.s32 0, %v393
    %v395 = vrot.slane %v390, %v394
    %v413 = vunpack.c.l.b16 %v374
    %v414 = vunpack.c.l.b16 %v375
    %v415 = vunpack.c.l.b16 %v376
    %v416 = vunpack.c.l.b16 %v377
    %v417 = vunpack.c.l.b16 %v378
    %v418 = vunpack.c.l.b16 %v379
    %v419 = vunpack.c.l.b16 %v380
    %v420 = vunpack.c.l.b16 %v381
    %v421 = vunpack.c.l.b16 %v382
    %v422 = vunpack.c.l.b16 %v383
    %v423 = vunpack.c.l.b16 %v384
    %v424 = vunpack.c.l.b16 %v385
    %v425 = vunpack.c.l.b16 %v386
    %v426 = vunpack.c.l.b16 %v387
    %v427 = vunpack.c.l.b16 %v388
    %v428 = vunpack.c.l.b16 %v389
    %v429 = vpack.c.b16 %v414, %v413
    %v430 = vpack.c.b16 %v416, %v415
    %v431 = vpack.c.b16 %v418, %v417
    %v432 = vpack.c.b16 %v420, %v419
    %v433 = vpack.c.b16 %v422, %v421
    %v434 = vpack.c.b16 %v424, %v423
    %v435 = vpack.c.b16 %v426, %v425
    %v436 = vpack.c.b16 %v428, %v427
    %445 = vmatprep.subr.bf16.mxu0 0
    %446 = vmatpush1.bf16.msra.mxu0 %v429
    %447 = vmatprep.subr.bf16.mxu0 0
    %448 = vmatpush1.bf16.msra.mxu0 %v430
    %449 = vmatprep.subr.bf16.mxu0 0
    %450 = vmatpush1.bf16.msra.mxu0 %v431
    %451 = vmatprep.subr.bf16.mxu0 0
    %452 = vmatpush1.bf16.msra.mxu0 %v432
    %453 = vmatprep.subr.bf16.mxu0 0
    %454 = vmatpush1.bf16.msra.mxu0 %v433
    %455 = vmatprep.subr.bf16.mxu0 0
    %456 = vmatpush1.bf16.msra.mxu0 %v434
    %457 = vmatprep.subr.bf16.mxu0 0
    %458 = vmatpush1.bf16.msra.mxu0 %v435
    %459 = vmatprep.subr.bf16.mxu0 0
    %460 = vmatpush1.bf16.msra.mxu0 %v436
    %461 = vmatprep.subr.bf16.mxu0 0
    %462 = vmatpush1.bf16.msra.mxu0 0
    %463 = vmatprep.subr.bf16.mxu0 0
    %464 = vmatpush1.bf16.msra.mxu0 0
    %465 = vmatprep.subr.bf16.mxu0 0
    %466 = vmatpush1.bf16.msra.mxu0 0
    %467 = vmatprep.subr.bf16.mxu0 0
    %468 = vmatpush1.bf16.msra.mxu0 0
    %469 = vmatprep.subr.bf16.mxu0 0
    %470 = vmatpush1.bf16.msra.mxu0 0
    %471 = vmatprep.subr.bf16.mxu0 0
    %472 = vmatpush1.bf16.msra.mxu0 0
    %473 = vmatprep.subr.bf16.mxu0 0
    %474 = vmatpush1.bf16.msra.mxu0 0
    %475 = vmatprep.subr.bf16.mxu0 0
    %476 = vmatpush1.bf16.msra.mxu0 0
    %477 = vmatprep.mubr.bf16.mxu0 0
    %478 = vmatmul.mubr.bf16.gmra.mrb[0].mxu0 %v253
    %v479 = vpop.f32.mrb[0].mxu0
    %v480 = vadd.f32 %v395, %v479
    %v481 = vpop.f32.mrb[0].mxu0
    %v482 = vpop.f32.mrb[0].mxu0
    %v483 = vadd.f32 %v395, %v482
    %v484 = vpop.f32.mrb[0].mxu0
    %485 = vmatprep.mubr.bf16.mxu0 0
    %486 = vmatmul.mubr.bf16.gmra.mrb[0].mxu0 %v254
    %v487 = vpop.f32.mrb[0].mxu0
    %v488 = vadd.f32 %v395, %v487
    %v489 = vpop.f32.mrb[0].mxu0
    %v490 = vpop.f32.mrb[0].mxu0
    %v491 = vpop.f32.mrb[0].mxu0
    %492 = vdwg.mxu0
    %v493 = vmul.f32 %v221, %v361
    %v494 = vmul.f32 %v221, %v364
    %v495 = vmul.f32 %v221, %v369
    %v496 = vld [vmem:[%s3] sm:$0xff]
    %v497 = vld [vmem:[%s3 + $0x8] sm:$0xff]
    %v498 = vld [vmem:[%s3 + $0x10] sm:$0xff]
    %v499 = vld [vmem:[%s3 + $0x18] sm:$0xff]
    %v500 = vld [vmem:[%s3 + $0x20] sm:$0xff]
    %v501 = vld [vmem:[%s3 + $0x28] sm:$0xff]
    %v502 = vld [vmem:[%s3 + $0x30] sm:$0xff]
    %v503 = vld [vmem:[%s3 + $0x38] sm:$0xff]
    %v504 = vld [vmem:[%s3 + $0x40] sm:$0xff]
    %v505 = vld [vmem:[%s3 + $0x48] sm:$0xff]
    %v506 = vld [vmem:[%s3 + $0x50] sm:$0xff]
    %v507 = vld [vmem:[%s3 + $0x58] sm:$0xff]
    %v508 = vld [vmem:[%s3 + $0x60] sm:$0xff]
    %v509 = vld [vmem:[%s3 + $0x68] sm:$0xff]
    %v510 = vld [vmem:[%s3 + $0x70] sm:$0xff]
    %v511 = vld [vmem:[%s3 + $0x78] sm:$0xff]
    %512 = vmatprep.subr.mxu0 0.0
    %513 = vmatpush1.msra.mxu0 %v496
    %514 = vmatprep.subr.mxu0 0.0
    %515 = vmatpush1.msra.mxu0 %v497
    %516 = vmatprep.subr.mxu0 0.0
    %517 = vmatpush1.msra.mxu0 %v498
    %518 = vmatprep.subr.mxu0 0.0
    %519 = vmatpush1.msra.mxu0 %v499
    %520 = vmatprep.subr.mxu0 0.0
    %521 = vmatpush1.msra.mxu0 %v500
    %522 = vmatprep.subr.mxu0 0.0
    %523 = vmatpush1.msra.mxu0 %v501
    %524 = vmatprep.subr.mxu0 0.0
    %525 = vmatpush1.msra.mxu0 %v502
    %526 = vmatprep.subr.mxu0 0.0
    %527 = vmatpush1.msra.mxu0 %v503
    %528 = vmatprep.subr.mxu0 0.0
    %529 = vmatpush1.msra.mxu0 %v504
    %530 = vmatprep.subr.mxu0 0.0
    %531 = vmatpush1.msra.mxu0 %v505
    %532 = vmatprep.subr.mxu0 0.0
    %533 = vmatpush1.msra.mxu0 %v506
    %534 = vmatprep.subr.mxu0 0.0
    %535 = vmatpush1.msra.mxu0 %v507
    %536 = vmatprep.subr.mxu0 0.0
    %537 = vmatpush1.msra.mxu0 %v508
    %538 = vmatprep.subr.mxu0 0.0
    %539 = vmatpush1.msra.mxu0 %v509
    %540 = vmatprep.subr.mxu0 0.0
    %541 = vmatpush1.msra.mxu0 %v510
    %542 = vmatprep.subr.mxu0 0.0
    %543 = vmatpush1.msra.mxu0 %v511
    %544 = vmatprep.subr.mxu0 0.0
    %545 = vmatpush1.msra.mxu0 0.0
    %546 = vmatprep.subr.mxu0 0.0
    %547 = vmatpush1.msra.mxu0 0.0
    %548 = vmatprep.subr.mxu0 0.0
    %549 = vmatpush1.msra.mxu0 0.0
    %550 = vmatprep.subr.mxu0 0.0
    %551 = vmatpush1.msra.mxu0 0.0
    %552 = vmatprep.subr.mxu0 0.0
    %553 = vmatpush1.msra.mxu0 0.0
    %554 = vmatprep.subr.mxu0 0.0
    %555 = vmatpush1.msra.mxu0 0.0
    %556 = vmatprep.subr.mxu0 0.0
    %557 = vmatpush1.msra.mxu0 0.0
    %558 = vmatprep.subr.mxu0 0.0
    %559 = vmatpush1.msra.mxu0 0.0
    %560 = vmatprep.subr.mxu0 0.0
    %561 = vmatpush1.msra.mxu0 0.0
    %562 = vmatprep.subr.mxu0 0.0
    %563 = vmatpush1.msra.mxu0 0.0
    %564 = vmatprep.subr.mxu0 0.0
    %565 = vmatpush1.msra.mxu0 0.0
    %566 = vmatprep.subr.mxu0 0.0
    %567 = vmatpush1.msra.mxu0 0.0
    %568 = vmatprep.subr.mxu0 0.0
    %569 = vmatpush1.msra.mxu0 0.0
    %570 = vmatprep.subr.mxu0 0.0
    %571 = vmatpush1.msra.mxu0 0.0
    %572 = vmatprep.subr.mxu0 0.0
    %573 = vmatpush1.msra.mxu0 0.0
    %574 = vmatprep.subr.mxu0 0.0
    %575 = vmatpush1.msra.mxu0 0.0
    %576 = vmatprep.mubr.f32.mxu0 0.0
    %577 = vmatmul.mubr.f32.gmra.mrb[0].mxu0 %v493
    %v578 = vpop.f32.mrb[0].mxu0
    %v579 = vadd.f32 0.0, %v578
    %v580 = vpop.f32.mrb[0].mxu0
    %581 = vmatprep.mubr.f32.mxu0 0.0
    %582 = vmatmul.mubr.f32.gmra.mrb[0].mxu0 %v494
    %v583 = vpop.f32.mrb[0].mxu0
    %v584 = vadd.f32 0.0, %v583
    %v585 = vpop.f32.mrb[0].mxu0
    %586 = vmatprep.mubr.f32.mxu0 0.0
    %587 = vmatmul.mubr.f32.gmra.mrb[0].mxu0 %v495
    %v588 = vpop.f32.mrb[0].mxu0
    %v589 = vadd.f32 0.0, %v588
    %v590 = vpop.f32.mrb[0].mxu0
    %591 = vdwg.mxu0
    %v592 = vmax.f32 %v579, %v584
    %v593 = vmax.f32 %v592, %v589
    %v594 = vsub.f32 %v579, %v593
    %v595 = vmul.f32 %v594, 1.442695
    %v596 = vpow.pop %v595
    %v597 = vsub.f32 %v584, %v593
    %v598 = vmul.f32 %v597, 1.442695
    %v599 = vpow.pop %v598
    %v600 = vsub.f32 %v589, %v593
    %v601 = vmul.f32 %v600, 1.442695
    %v602 = vpow.pop %v601
    %v603 = vadd.f32 %v596, %v599
    %v604 = vadd.f32 %v603, %v602
    %v605 = vrcp.pop %v604
    %v606 = vmul.f32 %v604, %v605
    %v607 = vsub.f32 2.0, %v606
    %v608 = vmul.f32 %v605, %v607
    %v609 = vmul.f32 %v596, %v608
    %v610 = vmul.f32 %v599, %v608
    %v611 = vmul.f32 %v602, %v608
    %v612 = vld [vmem:[%s4] sm:$0xf]
    %vm613 = vcmask 31744
    %v615 = vsel %vm613, %v609, 0
    %v618 = vsel %vm613, %v610, 0
    %v621 = vsel %vm613, %v611, 0
    %vm623 = vcmask 1043456
    %v625 = vsel %vm623, %v612, 0
    %627 = vmatprep.subr.mxu0 0.0
    %628 = vmatpush1.msra.mxu0 %v625
    %629 = vmatprep.subr.mxu0 0.0
    %630 = vmatpush1.msra.mxu0 0.0
    %631 = vmatprep.subr.mxu0 0.0
    %632 = vmatpush1.msra.mxu0 0.0
    %633 = vmatprep.subr.mxu0 0.0
    %634 = vmatpush1.msra.mxu0 0.0
    %635 = vmatprep.subr.mxu0 0.0
    %636 = vmatpush1.msra.mxu0 0.0
    %637 = vmatprep.subr.mxu0 0.0
    %638 = vmatpush1.msra.mxu0 0.0
    %639 = vmatprep.subr.mxu0 0.0
    %640 = vmatpush1.msra.mxu0 0.0
    %641 = vmatprep.subr.mxu0 0.0
    %642 = vmatpush1.msra.mxu0 0.0
    %643 = vmatprep.subr.mxu0 0.0
    %644 = vmatpush1.msra.mxu0 0.0
    %645 = vmatprep.subr.mxu0 0.0
    %646 = vmatpush1.msra.mxu0 0.0
    %647 = vmatprep.subr.mxu0 0.0
    %648 = vmatpush1.msra.mxu0 0.0
    %649 = vmatprep.subr.mxu0 0.0
    %650 = vmatpush1.msra.mxu0 0.0
    %651 = vmatprep.subr.mxu0 0.0
    %652 = vmatpush1.msra.mxu0 0.0
    %653 = vmatprep.subr.mxu0 0.0
    %654 = vmatpush1.msra.mxu0 0.0
    %655 = vmatprep.subr.mxu0 0.0
    %656 = vmatpush1.msra.mxu0 0.0
    %657 = vmatprep.subr.mxu0 0.0
    %658 = vmatpush1.msra.mxu0 0.0
    %659 = vmatprep.subr.mxu0 0.0
    %660 = vmatpush1.msra.mxu0 0.0
    %661 = vmatprep.subr.mxu0 0.0
    %662 = vmatpush1.msra.mxu0 0.0
    %663 = vmatprep.subr.mxu0 0.0
    %664 = vmatpush1.msra.mxu0 0.0
    %665 = vmatprep.subr.mxu0 0.0
    %666 = vmatpush1.msra.mxu0 0.0
    %667 = vmatprep.subr.mxu0 0.0
    %668 = vmatpush1.msra.mxu0 0.0
    %669 = vmatprep.subr.mxu0 0.0
    %670 = vmatpush1.msra.mxu0 0.0
    %671 = vmatprep.subr.mxu0 0.0
    %672 = vmatpush1.msra.mxu0 0.0
    %673 = vmatprep.subr.mxu0 0.0
    %674 = vmatpush1.msra.mxu0 0.0
    %675 = vmatprep.subr.mxu0 0.0
    %676 = vmatpush1.msra.mxu0 0.0
    %677 = vmatprep.subr.mxu0 0.0
    %678 = vmatpush1.msra.mxu0 0.0
    %679 = vmatprep.subr.mxu0 0.0
    %680 = vmatpush1.msra.mxu0 0.0
    %681 = vmatprep.subr.mxu0 0.0
    %682 = vmatpush1.msra.mxu0 0.0
    %683 = vmatprep.subr.mxu0 0.0
    %684 = vmatpush1.msra.mxu0 0.0
    %685 = vmatprep.subr.mxu0 0.0
    %686 = vmatpush1.msra.mxu0 0.0
    %687 = vmatprep.subr.mxu0 0.0
    %688 = vmatpush1.msra.mxu0 0.0
    %689 = vmatprep.subr.mxu0 0.0
    %690 = vmatpush1.msra.mxu0 0.0
    %691 = vmatprep.mubr.f32.mxu0 0.0
    %692 = vmatmul.mubr.f32.gmra.mrb[0].mxu0 %v615
    %v693 = vpop.f32.mrb[0].mxu0
    %v694 = vadd.f32 0.0, %v693
    %v695 = vpop.f32.mrb[0].mxu0
    %696 = vmatprep.mubr.f32.mxu0 0.0
    %697 = vmatmul.mubr.f32.gmra.mrb[0].mxu0 %v618
    %v698 = vpop.f32.mrb[0].mxu0
    %v699 = vadd.f32 0.0, %v698
    %v700 = vpop.f32.mrb[0].mxu0
    %701 = vmatprep.mubr.f32.mxu0 0.0
    %702 = vmatmul.mubr.f32.gmra.mrb[0].mxu0 %v621
    %v703 = vpop.f32.mrb[0].mxu0
    %v704 = vadd.f32 0.0, %v703
    %v705 = vpop.f32.mrb[0].mxu0
    %706 = vdwg.mxu0
    %v707 = vmul.f32 %v694, %v480
    %v708 = vmul.f32 %v699, %v483
    %v709 = vmul.f32 %v704, %v488
    %v710 = vadd.f32 %v707, %v708
    %v711 = vadd.f32 %v710, %v709
    %v712 = vpack.c.bf16 %v711, %v711
    %v713 = vld [vmem:[#allocation11] sm:$0xf]
    %v714 = vld [vmem:[#allocation11 + $0x4] sm:$0xf]
    %v715 = vld [vmem:[#allocation11 + $0x8] sm:$0xf]
    %v716 = vld [vmem:[#allocation11 + $0xc] sm:$0xf]
    %v717 = vld [vmem:[#allocation11 + $0x10] sm:$0xf]
    %v718 = vld [vmem:[#allocation11 + $0x14] sm:$0xf]
    %v719 = vld [vmem:[#allocation11 + $0x18] sm:$0xf]
    %v720 = vld [vmem:[#allocation11 + $0x1c] sm:$0xf]
    %v721 = vld [vmem:[#allocation11 + $0x20] sm:$0xf]
    %v722 = vld [vmem:[#allocation11 + $0x24] sm:$0xf]
    %v723 = vld [vmem:[#allocation11 + $0x28] sm:$0xf]
    %v724 = vld [vmem:[#allocation11 + $0x2c] sm:$0xf]
    %v725 = vld [vmem:[#allocation11 + $0x30] sm:$0xf]
    %v726 = vld [vmem:[#allocation11 + $0x34] sm:$0xf]
    %v727 = vld [vmem:[#allocation11 + $0x38] sm:$0xf]
    %v728 = vld [vmem:[#allocation11 + $0x3c] sm:$0xf]
    %v729 = vld [vmem:[%s12] sm:$0x1]
    %v731 = vlaneseq
    %v732 = vshrl.u32 %v731, 7
    %v733 = vsub.s32 0, %v732
    %v734 = vrot.slane %v729, %v733
    %v752 = vunpack.c.l.b16 %v713
    %v753 = vunpack.c.l.b16 %v714
    %v754 = vunpack.c.l.b16 %v715
    %v755 = vunpack.c.l.b16 %v716
    %v756 = vunpack.c.l.b16 %v717
    %v757 = vunpack.c.l.b16 %v718
    %v758 = vunpack.c.l.b16 %v719
    %v759 = vunpack.c.l.b16 %v720
    %v760 = vunpack.c.l.b16 %v721
    %v761 = vunpack.c.l.b16 %v722
    %v762 = vunpack.c.l.b16 %v723
    %v763 = vunpack.c.l.b16 %v724
    %v764 = vunpack.c.l.b16 %v725
    %v765 = vunpack.c.l.b16 %v726
    %v766 = vunpack.c.l.b16 %v727
    %v767 = vunpack.c.l.b16 %v728
    %v768 = vpack.c.b16 %v753, %v752
    %v769 = vpack.c.b16 %v755, %v754
    %v770 = vpack.c.b16 %v757, %v756
    %v771 = vpack.c.b16 %v759, %v758
    %v772 = vpack.c.b16 %v761, %v760
    %v773 = vpack.c.b16 %v763, %v762
    %v774 = vpack.c.b16 %v765, %v764
    %v775 = vpack.c.b16 %v767, %v766
    %784 = vmatprep.subr.bf16.mxu0 0
    %785 = vmatpush1.bf16.msra.mxu0 %v768
    %786 = vmatprep.subr.bf16.mxu0 0
    %787 = vmatpush1.bf16.msra.mxu0 %v769
    %788 = vmatprep.subr.bf16.mxu0 0
    %789 = vmatpush1.bf16.msra.mxu0 %v770
    %790 = vmatprep.subr.bf16.mxu0 0
    %791 = vmatpush1.bf16.msra.mxu0 %v771
    %792 = vmatprep.subr.bf16.mxu0 0
    %793 = vmatpush1.bf16.msra.mxu0 %v772
    %794 = vmatprep.subr.bf16.mxu0 0
    %795 = vmatpush1.bf16.msra.mxu0 %v773
    %796 = vmatprep.subr.bf16.mxu0 0
    %797 = vmatpush1.bf16.msra.mxu0 %v774
    %798 = vmatprep.subr.bf16.mxu0 0
    %799 = vmatpush1.bf16.msra.mxu0 %v775
    %800 = vmatprep.subr.bf16.mxu0 0
    %801 = vmatpush1.bf16.msra.mxu0 0
    %802 = vmatprep.subr.bf16.mxu0 0
    %803 = vmatpush1.bf16.msra.mxu0 0
    %804 = vmatprep.subr.bf16.mxu0 0
    %805 = vmatpush1.bf16.msra.mxu0 0
    %806 = vmatprep.subr.bf16.mxu0 0
    %807 = vmatpush1.bf16.msra.mxu0 0
    %808 = vmatprep.subr.bf16.mxu0 0
    %809 = vmatpush1.bf16.msra.mxu0 0
    %810 = vmatprep.subr.bf16.mxu0 0
    %811 = vmatpush1.bf16.msra.mxu0 0
    %812 = vmatprep.subr.bf16.mxu0 0
    %813 = vmatpush1.bf16.msra.mxu0 0
    %814 = vmatprep.subr.bf16.mxu0 0
    %815 = vmatpush1.bf16.msra.mxu0 0
    %816 = vmatprep.mubr.bf16.mxu0 0
    %817 = vmatmul.mubr.bf16.gmra.mrb[0].mxu0 %v712
    %v818 = vpop.f32.mrb[0].mxu0
    %v819 = vadd.f32 %v734, %v818
    %v820 = vpop.f32.mrb[0].mxu0
    %v821 = vpop.f32.mrb[0].mxu0
    %v822 = vpop.f32.mrb[0].mxu0
    %823 = vdwg.mxu0
    %v824 = vmax.f32 %v819, 0.0
    %825 = vst [vmem:[#allocation12] sm:$0xff] %v824
    %v826 = vsel %vm613, %v609, 0.0
    %827 = vadd.xlane.f32.xlu0 %v826
    %v828 = vpop.xlane.xlu0 %827
    %v829 = vmul.f32 %v828, 0.25
    %v830 = vsel %vm613, %v610, 0.0
    %831 = vadd.xlane.f32.xlu0 %v830
    %v832 = vpop.xlane.xlu0 %831
    %v833 = vmul.f32 %v832, 0.25
    %v834 = vsel %vm613, %v611, 0.0
    %835 = vadd.xlane.f32.xlu0 %v834
    %v836 = vpop.xlane.xlu0 %835
    %v837 = vmul.f32 %v836, 0.25
    %vm838 = vcmask 7168
    %v839 = vsel %vm838, %v829, %v833
    %vm840 = vcmask 15360
    %v841 = vsel %vm840, %v839, %v837
    %vm842 = vcmask 23552
    %v843 = vsel %vm842, %v841, 0.0
    %844 = vst [vmem:[#allocation13] sm:$0xff] %v843
    // Predicated region
    $region74: #{tpu_custom_call.1} parent=1 // pred_check
      _
    $region75: #{tpu_custom_call.1} parent=1 // pred_check_branch
      %846 = sbr.rel (0) target = $region77
    $region76: #{tpu_custom_call.1} parent=1 // pred_region
      %s848 = ssub.s32 128, 128
      %849 = vsyncadd [#allocation4], %s848
      %s851 = sshll.u32 [#allocation12], 4
      %s852 = int_to_ptr.vmem [resolvable:$true] %s851
      %854 = dma.vmem_to_hbm [thread:$0]  %s852, 128, %s13, [#allocation4]
    $region77: #{tpu_custom_call.1} parent=1 // pred_fallthru
      _
    // Predicated region
    $region78: #{tpu_custom_call.1} parent=1 // pred_check
      _
    $region79: #{tpu_custom_call.1} parent=1 // pred_check_branch
      %856 = sbr.rel (0) target = $region81
    $region80: #{tpu_custom_call.1} parent=1 // pred_region
      %s858 = ssub.s32 128, 128
      %859 = vsyncadd [#allocation14], %s858
      %s861 = sshll.u32 [#allocation13], 4
      %s862 = int_to_ptr.vmem [resolvable:$true] %s861
      %864 = dma.vmem_to_hbm [thread:$0]  %s862, 128, %s14, [#allocation14]
    $region81: #{tpu_custom_call.1} parent=1 // pred_fallthru
      _
    // Predicated region
    $region82: #{tpu_custom_call.1} parent=1 // pred_check
      _
    $region83: #{tpu_custom_call.1} parent=1 // pred_check_branch
      %866 = sbr.rel (0) target = $region85
    $region84: #{tpu_custom_call.1} parent=1 // pred_region
      %867 = dma.done [#allocation4], 128
    $region85: #{tpu_custom_call.1} parent=1 // pred_fallthru
      _
    // Predicated region
    $region86: #{tpu_custom_call.1} parent=1 // pred_check
      _
    $region87: #{tpu_custom_call.1} parent=1 // pred_check_branch
      %869 = sbr.rel (0) target = $region89
    $region88: #{tpu_custom_call.1} parent=1 // pred_region
      %870 = dma.done [#allocation14], 128
    $region89: #{tpu_custom_call.1} parent=1 // pred_fallthru
      _
    %871 = vsyncpa [#allocation3], 1
    %872 = vsyncpa [#allocation10], 1
    %873 = vsyncpa [#allocation4], 1
    %874 = vsyncpa [#allocation14], 1
    %875 = vsyncpa [#allocation5], 1
    %876 = vsyncpa [#allocation6], 1

</llo_original>
